<compile_context>
chip_gen: v5e
topology: v5e:2x2
jax: 0.10.0
libtpu: 0.0.40
codegen_flags: <defaults>
</compile_context>

<pallas_src>
import functools

import jax
import jax.numpy as jnp
from jax.experimental import pallas as pl
from jax.experimental.pallas import tpu as pltpu


# ----------------------------------------------------------------------------
# Diffusion schedule (module __init__) — plain JAX glue, computed once.
# ----------------------------------------------------------------------------
def make_schedule(timesteps=1000, beta_start=1e-4, beta_end=2e-2):
    betas = jnp.linspace(beta_start, beta_end, timesteps, dtype=jnp.float32)
    alphas = 1.0 - betas
    alphas_cumprod = jnp.cumprod(alphas)
    alphas_cumprod_prev = jnp.pad(alphas_cumprod[:-1], (1, 0), constant_values=1.0)
    sqrt_recip_alphas = jnp.sqrt(1.0 / alphas)
    sqrt_alphas_cumprod = jnp.sqrt(alphas_cumprod)
    sqrt_one_minus_alphas_cumprod = jnp.sqrt(1.0 - alphas_cumprod)
    posterior_variance = betas * (1.0 - alphas_cumprod_prev) / (1.0 - alphas_cumprod)
    return dict(
        betas=betas,
        alphas=alphas,
        alphas_cumprod=alphas_cumprod,
        sqrt_recip_alphas=sqrt_recip_alphas,
        sqrt_alphas_cumprod=sqrt_alphas_cumprod,
        sqrt_one_minus_alphas_cumprod=sqrt_one_minus_alphas_cumprod,
        posterior_variance=posterior_variance,
    )


# ----------------------------------------------------------------------------
# Static surrogate-denoise parameters, packed ONCE into a (BC, 128) slab:
#   cols 0..BC-1 : block-diagonal 1x1-conv weight (w repeated per batch)
#   col  BC      : sqrt_alphas_cumprod[t]      (filled per call)
#   col  BC+1    : sqrt(1 - alphas_cumprod)[t] (filled per call)
#   col  BC+2    : conv bias (per channel, tiled over batch)
# ----------------------------------------------------------------------------
def make_denoise_params(w, bias, B, lanes=128):
    C = w.shape[0]
    BC = B * C
    assert BC + 3 <= lanes
    w_big = jnp.kron(jnp.eye(B, dtype=jnp.float32), w.astype(jnp.float32))   # (BC, BC)
    bias_col = jnp.tile(bias.astype(jnp.float32), B).reshape(BC, 1)          # (BC, 1)
    base = jnp.zeros((BC, lanes), dtype=jnp.float32)
    base = base.at[:, 0:BC].set(w_big)
    base = base.at[:, BC + 2:BC + 3].set(bias_col)
    return base


# ----------------------------------------------------------------------------
# Fused kernel: q_sample + surrogate denoise (one MXU dot) + mean-L1 scalar.
# Single invocation (no grid); the whole slab is (BC, HW) = (8, 256) f32.
# ----------------------------------------------------------------------------
def diffusion_kernel(x_ref, n_ref, p_ref, pred_ref, loss_ref, *, inv_count):
    bc = x_ref.shape[0]

    x = x_ref[...]                        # (BC, HW)  x_start slab
    n = n_ref[...]                        # (BC, HW)  noise slab

    # Static lane slices of the coalesced params slab (zero-cost views).
    wb = p_ref[:, 0:bc]                   # (BC, BC) block-diagonal weights
    sa = p_ref[:, bc:bc + 1]              # (BC, 1)  sqrt_alphas_cumprod[t]
    sb = p_ref[:, bc + 1:bc + 2]          # (BC, 1)  sqrt(1-alphas_cumprod)[t]
    bias = p_ref[:, bc + 2:bc + 3]        # (BC, 1)  conv bias

    # q_sample: x_noisy = sqrt_ac[t] * x_start + sqrt_1m_ac[t] * noise  (VPU)
    x_noisy = sa * x + sb * n

    # Surrogate denoise model: per-batch 1x1 conv over channels as one small
    # MXU matmul (block-diagonal (BC,BC) x (BC,HW)) + bias column broadcast.
    pred = jnp.dot(wb, x_noisy, preferred_element_type=jnp.float32) + bias
    pred_ref[...] = pred.astype(pred_ref.dtype)

    # F.l1_loss (mean): fold the 1/N scale in-kernel, scalar to SMEM.
    loss_ref[0, 0] = jnp.sum(jnp.abs(n - pred)) * inv_count


# ----------------------------------------------------------------------------
# Jitted wrapper (per-call path): gather sa/sb, patch the params slab,
# reshape NCHW -> (BC, HW), one pallas_call.
# ----------------------------------------------------------------------------
@jax.jit
def diffusion_compute_loss(x_start, t, noise, sqrt_ac, sqrt_1m_ac, base_slab):
    """Pallas-backed equivalent of DiffusionModel.compute_loss (loss_type='l1').

    x_start, noise : (B, C, H, W) float32 (NCHW, as in PyTorch)
    t              : (B,) int32
    Returns (loss, noise, predicted_noise) with predicted_noise in NCHW.
    """
    B, C, H, W = x_start.shape
    BC, HW = B * C, H * W

    # extract(...) from the reference: per-batch schedule scalars -> per-row
    # (BC, 1) columns, written into the static params slab (fused under jit).
    sa_col = jnp.repeat(sqrt_ac[t].astype(jnp.float32), C).reshape(BC, 1)
    sb_col = jnp.repeat(sqrt_1m_ac[t].astype(jnp.float32), C).reshape(BC, 1)
    slab = base_slab.at[:, BC:BC + 1].set(sa_col)
    slab = slab.at[:, BC + 1:BC + 2].set(sb_col)

    # Collapse batch into the sublane axis: (B, C, H, W) -> (BC, HW).
    x2 = x_start.reshape(BC, HW).astype(jnp.float32)
    n2 = noise.reshape(BC, HW).astype(jnp.float32)

    kernel = functools.partial(diffusion_kernel, inv_count=1.0 / (B * C * H * W))

    pred2, loss = pl.pallas_call(
        kernel,
        out_shape=(
            jax.ShapeDtypeStruct((BC, HW), jnp.float32),   # predicted noise
            jax.ShapeDtypeStruct((1, 1), jnp.float32),     # mean-L1 scalar
        ),
        in_specs=[
            pl.BlockSpec(memory_space=pltpu.MemorySpace.VMEM),   # x2
            pl.BlockSpec(memory_space=pltpu.MemorySpace.VMEM),   # n2
            pl.BlockSpec(memory_space=pltpu.MemorySpace.VMEM),   # params slab
        ],
        out_specs=(
            pl.BlockSpec(memory_space=pltpu.MemorySpace.VMEM),   # pred (lane-dense)
            pl.BlockSpec(memory_space=pltpu.MemorySpace.SMEM),   # scalar loss
        ),
    )(x2, n2, slab)

    return loss[0, 0], noise, pred2.reshape(B, C, H, W)


# ----------------------------------------------------------------------------
# Pure-JAX reference for correctness check.
# ----------------------------------------------------------------------------
def reference_compute_loss(x_start, t, noise, schedule, w, bias):
    B, C, H, W = x_start.shape
    sa = schedule["sqrt_alphas_cumprod"][t].reshape(B, 1, 1, 1)
    sb = schedule["sqrt_one_minus_alphas_cumprod"][t].reshape(B, 1, 1, 1)
    x_noisy = sa * x_start + sb * noise
    pred = jnp.einsum("oc,bchw->bohw", w, x_noisy) + bias.reshape(1, C, 1, 1)
    loss = jnp.mean(jnp.abs(noise - pred))
    return loss, noise, pred


if __name__ == "__main__":
    B, C, H, W = 2, 4, 16, 16
    timesteps = 1000

    key = jax.random.PRNGKey(0)
    k1, k2, k3, k4, k5 = jax.random.split(key, 5)

    x_start = jax.random.normal(k1, (B, C, H, W), dtype=jnp.float32)
    noise = jax.random.normal(k2, (B, C, H, W), dtype=jnp.float32)
    t = jax.random.randint(k3, (B,), 0, timesteps, dtype=jnp.int32)

    # Deterministic surrogate denoise-model parameters (1x1 conv: C -> C).
    w = 0.1 * jax.random.normal(k4, (C, C), dtype=jnp.float32)
    bias = 0.05 * jax.random.normal(k5, (C,), dtype=jnp.float32)

    schedule = make_schedule(timesteps=timesteps)
    base_slab = make_denoise_params(w, bias, B)          # precomputed once

    loss, noise_out, pred = diffusion_compute_loss(
        x_start, t, noise,
        schedule["sqrt_alphas_cumprod"],
        schedule["sqrt_one_minus_alphas_cumprod"],
        base_slab,
    )
    loss = jax.block_until_ready(loss)
    pred = jax.block_until_ready(pred)

    # Check against pure-JAX reference.
    loss_ref, _, pred_ref = reference_compute_loss(x_start, t, noise, schedule, w, bias)
    assert jnp.allclose(pred, pred_ref, rtol=1e-5, atol=1e-4), "pred mismatch"
    assert jnp.allclose(loss, loss_ref, rtol=1e-5, atol=1e-4), "loss mismatch"

    print("KERNEL_OK")
</pallas_src>

<mosaic_0001>
module attributes {stable_mosaic.version = 11 : i64} {
  func.func @diffusion_kernel(%arg0: memref<8x256xf32, #tpu.memory_space<vmem>>, %arg1: memref<8x256xf32, #tpu.memory_space<vmem>>, %arg2: memref<8x128xf32, #tpu.memory_space<vmem>>, %arg3: memref<8x256xf32, #tpu.memory_space<vmem>>, %arg4: memref<1x1xf32, #tpu.memory_space<smem>>) attributes {dimension_semantics = [], scalar_prefetch = 0 : i64, scratch_operands = 0 : i64, tpu.core_type = #tpu.core_type<tc>} {
    %c0 = arith.constant 0 : index
    %c0_0 = arith.constant 0 : index
    %0 = vector.load %arg0[%c0, %c0_0] : memref<8x256xf32, #tpu.memory_space<vmem>>, vector<8x256xf32>
    %c0_1 = arith.constant 0 : index
    %c0_2 = arith.constant 0 : index
    %1 = vector.load %arg1[%c0_1, %c0_2] : memref<8x256xf32, #tpu.memory_space<vmem>>, vector<8x256xf32>
    %c0_3 = arith.constant 0 : index
    %c0_4 = arith.constant 0 : index
    %2 = vector.load %arg2[%c0_3, %c0_4] : memref<8x128xf32, #tpu.memory_space<vmem>>, vector<8x8xf32>
    %c0_5 = arith.constant 0 : index
    %c8 = arith.constant 8 : index
    %3 = vector.load %arg2[%c0_5, %c8] : memref<8x128xf32, #tpu.memory_space<vmem>>, vector<8x1xf32>
    %c0_6 = arith.constant 0 : index
    %c9 = arith.constant 9 : index
    %4 = vector.load %arg2[%c0_6, %c9] : memref<8x128xf32, #tpu.memory_space<vmem>>, vector<8x1xf32>
    %c0_7 = arith.constant 0 : index
    %c10 = arith.constant 10 : index
    %5 = vector.load %arg2[%c0_7, %c10] : memref<8x128xf32, #tpu.memory_space<vmem>>, vector<8x1xf32>
    %6 = vector.broadcast %3 : vector<8x1xf32> to vector<8x256xf32>
    %7 = arith.mulf %6, %0 : vector<8x256xf32>
    %8 = vector.broadcast %4 : vector<8x1xf32> to vector<8x256xf32>
    %9 = arith.mulf %8, %1 : vector<8x256xf32>
    %10 = arith.addf %7, %9 : vector<8x256xf32>
    %cst = arith.constant dense<0.000000e+00> : vector<8x256xf32>
    %11 = tpu.matmul %2, %10, %cst {dimension_numbers = #tpu.dot_dimension_numbers<[1], [0], [0], [1], [0, 0, 1, 1], [], []>} : vector<8x8xf32>, vector<8x256xf32>, vector<8x256xf32> -> vector<8x256xf32>
    %12 = vector.broadcast %5 : vector<8x1xf32> to vector<8x256xf32>
    %13 = arith.addf %11, %12 : vector<8x256xf32>
    %c0_8 = arith.constant 0 : index
    %c0_9 = arith.constant 0 : index
    %14 = vector.load %arg3[%c0_8, %c0_9] : memref<8x256xf32, #tpu.memory_space<vmem>>, vector<8x256xf32>
    tpu.vector_store %arg3[%c0_8, %c0_9], %13 {strides = array<i32>} : memref<8x256xf32, #tpu.memory_space<vmem>>, vector<8x256xf32>,
    %15 = arith.subf %1, %13 : vector<8x256xf32>
    %16 = math.absf %15 : vector<8x256xf32>
    %17 = vector.shape_cast %16 : vector<8x256xf32> to vector<1x8x256xf32>
    %cst_10 = arith.constant dense<0.000000e+00> : vector<1xf32>
    %18 = vector.multi_reduction <add>, %17, %cst_10 [1, 2] : vector<1x8x256xf32> to vector<1xf32>
    %19 = vector.shape_cast %18 : vector<1xf32> to vector<1x1x1xf32>
    %20 = vector.extract %19[0, 0, 0] : f32 from vector<1x1x1xf32>
    %cst_11 = arith.constant 4.8828125E-4 : f32
    %21 = arith.mulf %20, %cst_11 : f32
    %c0_12 = arith.constant 0 : index
    %c0_13 = arith.constant 0 : index
    %22 = memref.load %arg4[%c0_12, %c0_13] : memref<1x1xf32, #tpu.memory_space<smem>>
    memref.store %21, %arg4[%c0_12, %c0_13] : memref<1x1xf32, #tpu.memory_space<smem>>
    return
  }
}

</mosaic_0001>

<llo_original>
// kernel: diffusion_compute_loss.1
$region0: #{diffusion_compute_loss.1}
  #allocation0 [shape = 'u32[]', space=smem, size = 0x4, offset = 0x4, fixed_abs, tag = 'smem constant byte address 0x4 - core index']
  #allocation1 [shape = 'u32[72,128]{1,0:T(1,128)}', space=vmem, size = 0x9000, scoped, tag = 'internal scratch']
  %s0 = inlined_call_operand.vmem [shape: f32[8,256], index: 0, kind: input, shape index: {}]
  %s1 = inlined_call_operand.vmem [shape: f32[8,256], index: 1, kind: input, shape index: {}]
  %s2 = inlined_call_operand.vmem [shape: f32[8,128], index: 2, kind: input, shape index: {}]
  %s3 = inlined_call_operand.vmem [shape: f32[8,256], index: 3, kind: output, shape index: {0}]
  %s4 = inlined_call_operand.hbm [shape: f32[1,1], index: 4, kind: output, shape index: {1}]
  %5 = xla_tuple %s3, %s4
  %s6 = sld [smem:[#allocation0]]
  $region30: #{diffusion_compute_loss.1} parent=0
    _
  %s8 = ssub.s32 1, %s6
  %s9 = scalar_select 0, %s8, %s6
  $region1: #{diffusion_compute_loss.1} parent=0
    #allocation2 [shape = 'u8[512]{0}', space=smem, size = 0x200, scoped, tag = 'output window, operand 1, single buffered']
    #allocation3 [shape = 's32[1]{0}', space=sflag, size = 0x4, scoped, tag = 'scoped memory for diffusion_compute_loss.1']
    %10 = vsyncpa [#allocation3], 0
    // Predicated region
    $region2: #{diffusion_compute_loss.1} parent=1 // pred_check
      _
    $region3: #{diffusion_compute_loss.1} parent=1 // pred_check_branch
      %12 = sbr.rel (0) target = $region5
    $region4: #{diffusion_compute_loss.1} parent=1 // pred_region
      _
    $region5: #{diffusion_compute_loss.1} parent=1 // pred_fallthru
      _
    // Predicated region
    $region6: #{diffusion_compute_loss.1} parent=1 // pred_check
      _
    $region7: #{diffusion_compute_loss.1} parent=1 // pred_check_branch
      %14 = sbr.rel (0) target = $region9
    $region8: #{diffusion_compute_loss.1} parent=1 // pred_region
      _
    $region9: #{diffusion_compute_loss.1} parent=1 // pred_fallthru
      _
    // Predicated region
    $region10: #{diffusion_compute_loss.1} parent=1 // pred_check
      _
    $region11: #{diffusion_compute_loss.1} parent=1 // pred_check_branch
      %16 = sbr.rel (0) target = $region13
    $region12: #{diffusion_compute_loss.1} parent=1 // pred_region
      _
    $region13: #{diffusion_compute_loss.1} parent=1 // pred_fallthru
      _
    %v17 = vld [vmem:[%s0] sm:$0xff]
    %v18 = vld [vmem:[%s0 + $0x8] sm:$0xff]
    %v19 = vld [vmem:[%s1] sm:$0xff]
    %v20 = vld [vmem:[%s1 + $0x8] sm:$0xff]
    %v21 = vld [vmem:[%s2] sm:$0xff]
    %23 = vset.pattern.permute.xlu0 8
    %24 = vperm.xlu0 %23, %v21
    %v25 = vpop.permute.xlu0 %24
    %v27 = vmul.f32 %v25, %v17
    %v28 = vmul.f32 %v25, %v18
    %29 = vset.pattern.permute.xlu0 9
    %30 = vperm.xlu0 %29, %v21
    %v31 = vpop.permute.xlu0 %30
    %v33 = vmul.f32 %v31, %v19
    %v34 = vmul.f32 %v31, %v20
    %v35 = vadd.f32 %v27, %v33
    %v36 = vadd.f32 %v28, %v34
    %37 = vset.pattern.permute.xlu0 10
    %38 = vperm.xlu0 %37, %v21
    %v39 = vpop.permute.xlu0 %38
    %vm41 = vcmask 64512
    %v42 = vsel %vm41, %v21, 0
    %44 = vmatpush.msra.mxu0 0.0
    %45 = vmatpush.msra.mxu0 0.0
    %46 = vmatpush.msra.mxu0 0.0
    %47 = vmatpush.msra.mxu0 0.0
    %48 = vmatpush.msra.mxu0 0.0
    %49 = vmatpush.msra.mxu0 0.0
    %50 = vmatpush.msra.mxu0 0.0
    %51 = vmatpush.msra.mxu0 0.0
    %52 = vmatpush.msra.mxu0 0.0
    %53 = vmatpush.msra.mxu0 0.0
    %54 = vmatpush.msra.mxu0 0.0
    %55 = vmatpush.msra.mxu0 0.0
    %56 = vmatpush.msra.mxu0 0.0
    %57 = vmatpush.msra.mxu0 0.0
    %58 = vmatpush.msra.mxu0 0.0
    %59 = vmatpush.msra.mxu0 %v35
    %60 = vmatmul.f32.gmra.mxu0 %v42
    %v61 = vpop.f32.mrf.mxu0
    %v62 = vadd.f32 %v39, %v61
    %63 = vdwg.mxu0
    %64 = vmatpush.msra.mxu0 0.0
    %65 = vmatpush.msra.mxu0 0.0
    %66 = vmatpush.msra.mxu0 0.0
    %67 = vmatpush.msra.mxu0 0.0
    %68 = vmatpush.msra.mxu0 0.0
    %69 = vmatpush.msra.mxu0 0.0
    %70 = vmatpush.msra.mxu0 0.0
    %71 = vmatpush.msra.mxu0 0.0
    %72 = vmatpush.msra.mxu0 0.0
    %73 = vmatpush.msra.mxu0 0.0
    %74 = vmatpush.msra.mxu0 0.0
    %75 = vmatpush.msra.mxu0 0.0
    %76 = vmatpush.msra.mxu0 0.0
    %77 = vmatpush.msra.mxu0 0.0
    %78 = vmatpush.msra.mxu0 0.0
    %79 = vmatpush.msra.mxu0 %v36
    %80 = vmatmul.f32.gmra.mxu0 %v42
    %v81 = vpop.f32.mrf.mxu0
    %v82 = vadd.f32 %v39, %v81
    %83 = vdwg.mxu0
    %84 = vst [vmem:[%s3] sm:$0xff] %v62
    %85 = vst [vmem:[%s3 + $0x8] sm:$0xff] %v82
    %v86 = vsub.f32 %v19, %v62
    %v87 = vsub.f32 %v20, %v82
    %v88 = vand.u32 2147483647, %v86
    %v89 = vand.u32 2147483647, %v87
    %v90 = vadd.f32 %v88, %v89
    %91 = vadd.xlane.f32.xlu0 %v90
    %v92 = vpop.xlane.xlu0 %91
    %v93 = vrot.slane %v92, 4
    %v94 = vadd.f32 %v92, %v93
    %v95 = vrot.slane %v94, 2
    %v96 = vadd.f32 %v94, %v95
    %v97 = vrot.slane %v96, 1
    %v98 = vadd.f32 %v96, %v97
    %s99 = vtos %v98
    %s100 = smul.f32 %s99, 0.00048828125
    %s101 = scalar_lea.smem [#allocation2], 0
    %102 = sst [smem:[%s101]] %s100
    // Predicated region
    $region14: #{diffusion_compute_loss.1} parent=1 // pred_check
      _
    $region15: #{diffusion_compute_loss.1} parent=1 // pred_check_branch
      %104 = sbr.rel (0) target = $region17
    $region16: #{diffusion_compute_loss.1} parent=1 // pred_region
      _
    $region17: #{diffusion_compute_loss.1} parent=1 // pred_fallthru
      _
    // Predicated region
    $region18: #{diffusion_compute_loss.1} parent=1 // pred_check
      _
    $region19: #{diffusion_compute_loss.1} parent=1 // pred_check_branch
      %106 = sbr.rel (0) target = $region21
    $region20: #{diffusion_compute_loss.1} parent=1 // pred_region
      %108 = vsyncadd [#allocation3], 0
      %s110 = sshll.u32 %s4, 4
      %s111 = int_to_ptr.hbm [resolvable:$true] %s110
      %113 = dma.smem_to_hbm [#allocation2], 16, %s111, [#allocation3]
    $region21: #{diffusion_compute_loss.1} parent=1 // pred_fallthru
      _
    // Predicated region
    $region22: #{diffusion_compute_loss.1} parent=1 // pred_check
      _
    $region23: #{diffusion_compute_loss.1} parent=1 // pred_check_branch
      %115 = sbr.rel (0) target = $region25
    $region24: #{diffusion_compute_loss.1} parent=1 // pred_region
      _
    $region25: #{diffusion_compute_loss.1} parent=1 // pred_fallthru
      _
    // Predicated region
    $region26: #{diffusion_compute_loss.1} parent=1 // pred_check
      _
    $region27: #{diffusion_compute_loss.1} parent=1 // pred_check_branch
      %117 = sbr.rel (0) target = $region29
    $region28: #{diffusion_compute_loss.1} parent=1 // pred_region
      %119 = dma.done [#allocation3], 16
    $region29: #{diffusion_compute_loss.1} parent=1 // pred_fallthru
      _
    %120 = sfence
    %121 = vsyncpa [#allocation3], 1

</llo_original>
